<compile_context>
chip_gen: v7x
topology: tpu7x:2x2x1
jax: 0.10.0
libtpu: 0.0.40
codegen_flags: <defaults>
</compile_context>

<pallas_src>
import jax
import jax.numpy as jnp
from jax.experimental import pallas as pl
from jax.experimental.pallas import tpu as pltpu

TM = 512                 # row tile over M = N*H*W (big tiles: ~85% HBM roofline)
LANE = 128               # pad Cout to a multiple of 128 -> unmasked, lane-dense stores
_VMEM_LIMIT = 32 * 1024 * 1024   # safe on v5e / v6e / v7x; tiles here need ~2 MiB


def _round_up(x, m):
    return ((x + m - 1) // m) * m


# ---------------------------------------------------------------- kernels ---
def _matmul_stats_kernel(x_ref, w_ref, y_ref, sum_ref, sq_ref):
    """y = x @ w (bf16 in, f32 out) + per-tile channel sum / sum-of-squares.

    Partial stats are written per grid step (reduced in JAX afterwards) instead
    of using a resident accumulator, so the grid axis can stay "parallel"
    (megacore sharding on v7x)."""
    y = jnp.dot(x_ref[...], w_ref[...], preferred_element_type=jnp.float32)
    y_ref[...] = y
    sum_ref[0] = jnp.sum(y, axis=0, keepdims=True)
    sq_ref[0] = jnp.sum(y * y, axis=0, keepdims=True)


def _affine_relu_kernel(y_ref, scale_ref, shift_ref, o_ref):
    """Fused BatchNorm (folded to a per-channel affine) + ReLU; bf16 output."""
    o = jnp.maximum(y_ref[...] * scale_ref[...] + shift_ref[...], 0.0)
    o_ref[...] = o.astype(o_ref.dtype)


def _matmul_sigmoid_kernel(x_ref, w_ref, o_ref):
    """y = sigmoid(x @ w) for the final layer (no BN).

    exp and the approximate reciprocal both issue on the EUP slot, keeping the
    divide off the VALU."""
    y = jnp.dot(x_ref[...], w_ref[...], preferred_element_type=jnp.float32)
    o_ref[...] = pl.reciprocal(1.0 + jnp.exp(-y), approx=True)


# ------------------------------------------------------------------- glue ---
def _pad_rows(x, tm):
    m = x.shape[0]
    mp = _round_up(m, tm)
    if mp != m:
        x = jnp.pad(x, ((0, mp - m), (0, 0)))
    return x, mp


def _im2col(x_nhwc):
    """3x3 same-conv patches, channel-last ordering (dy, dx, cin). bf16 in/out."""
    n, h, w, c = x_nhwc.shape
    xp = jnp.pad(x_nhwc, ((0, 0), (1, 1), (1, 1), (0, 0)))
    patches = [xp[:, dy:dy + h, dx:dx + w, :] for dy in range(3) for dx in range(3)]
    col = jnp.concatenate(patches, axis=-1)            # (N, H, W, 9*Cin)
    return col.reshape(n * h * w, 9 * c)


def _convT_to_matrix(wt, cout_p):
    """ConvTranspose2d weight (Cin, Cout, 3, 3) -> conv matrix (9*Cin, cout_p) bf16.

    ConvTranspose2d(k=3, s=1, p=1) == Conv2d(k=3, p=1) with a spatially flipped,
    channel-transposed kernel: W_conv[o, i, dy, dx] = W_T[i, o, 2-dy, 2-dx].
    Columns are zero-padded to `cout_p` so every store is lane-dense."""
    cin, cout = wt.shape[0], wt.shape[1]
    w_flip = wt[:, :, ::-1, ::-1]
    w = jnp.transpose(w_flip, (2, 3, 0, 1)).reshape(9 * cin, cout)
    if cout_p > cout:
        w = jnp.pad(w, ((0, 0), (0, cout_p - cout)))
    return w.astype(jnp.bfloat16)


def _conv_bn_relu(x_col, w_mat, gamma_p, beta_p, m_true, cout_true, eps=1e-5):
    k = x_col.shape[1]
    cp = w_mat.shape[1]
    xp, mp = _pad_rows(x_col, TM)
    grid = (mp // TM,)
    g = grid[0]

    y, s_part, sq_part = pl.pallas_call(
        _matmul_stats_kernel,
        out_shape=(
            jax.ShapeDtypeStruct((mp, cp), jnp.float32),
            jax.ShapeDtypeStruct((g, 1, cp), jnp.float32),
            jax.ShapeDtypeStruct((g, 1, cp), jnp.float32),
        ),
        grid_spec=pltpu.PrefetchScalarGridSpec(
            num_scalar_prefetch=0,
            grid=grid,
            in_specs=[
                pl.BlockSpec((TM, k), lambda i: (i, 0)),
                pl.BlockSpec((k, cp), lambda i: (0, 0)),
            ],
            out_specs=[
                pl.BlockSpec((TM, cp), lambda i: (i, 0)),
                pl.BlockSpec((1, 1, cp), lambda i: (i, 0, 0)),
                pl.BlockSpec((1, 1, cp), lambda i: (i, 0, 0)),
            ],
        ),
        compiler_params=pltpu.CompilerParams(
            dimension_semantics=("parallel",),
            vmem_limit_bytes=_VMEM_LIMIT,
        ),
    )(xp, w_mat)

    # Training-mode BatchNorm2d statistics (biased variance), folded to affine.
    # One-pass E[y^2]-E[y]^2 in f32; fine for BN-scale activations.
    s = jnp.sum(s_part, axis=(0, 1))
    sq = jnp.sum(sq_part, axis=(0, 1))
    mean = s / m_true
    var = sq / m_true - mean * mean
    scale = gamma_p * jax.lax.rsqrt(var + eps)
    shift = beta_p - mean * scale

    act = pl.pallas_call(
        _affine_relu_kernel,
        out_shape=jax.ShapeDtypeStruct((mp, cp), jnp.bfloat16),
        grid_spec=pltpu.PrefetchScalarGridSpec(
            num_scalar_prefetch=0,
            grid=grid,
            in_specs=[
                pl.BlockSpec((TM, cp), lambda i: (i, 0)),
                pl.BlockSpec((1, cp), lambda i: (0, 0)),
                pl.BlockSpec((1, cp), lambda i: (0, 0)),
            ],
            out_specs=pl.BlockSpec((TM, cp), lambda i: (i, 0)),
        ),
        compiler_params=pltpu.CompilerParams(
            dimension_semantics=("parallel",),
            vmem_limit_bytes=_VMEM_LIMIT,
        ),
    )(y, scale[None, :], shift[None, :])
    return act[:m_true, :cout_true]


def _conv_sigmoid(x_col, w_mat, m_true, cout_true):
    k = x_col.shape[1]
    cp = w_mat.shape[1]
    xp, mp = _pad_rows(x_col, TM)
    grid = (mp // TM,)

    out = pl.pallas_call(
        _matmul_sigmoid_kernel,
        out_shape=jax.ShapeDtypeStruct((mp, cp), jnp.float32),
        grid_spec=pltpu.PrefetchScalarGridSpec(
            num_scalar_prefetch=0,
            grid=grid,
            in_specs=[
                pl.BlockSpec((TM, k), lambda i: (i, 0)),
                pl.BlockSpec((k, cp), lambda i: (0, 0)),
            ],
            out_specs=pl.BlockSpec((TM, cp), lambda i: (i, 0)),
        ),
        compiler_params=pltpu.CompilerParams(
            dimension_semantics=("parallel",),
            vmem_limit_bytes=_VMEM_LIMIT,
        ),
    )(xp, w_mat)
    return out[:m_true, :cout_true]


# ------------------------------------------------------------------ model ---
class GeneratorPallas:
    """Pallas/JAX re-implementation of the PyTorch Generator module."""

    def __init__(self, inputsize, hiddensize, outputsize, key):
        self.inputsize = inputsize
        self.hiddensize = hiddensize
        self.outputsize = outputsize
        ks = jax.random.split(key, 4)

        def init_wt(k, cin, cout):
            # ConvTranspose2d weight shape: (in_channels, out_channels, 3, 3)
            bound = 1.0 / float((cin * 9) ** 0.5)
            return jax.random.uniform(k, (cin, cout, 3, 3), jnp.float32, -bound, bound)

        h = hiddensize
        cins = (inputsize, h * 8, h * 4, h * 2)
        couts = (h * 8, h * 4, h * 2, outputsize)
        self.couts = couts
        self.couts_p = tuple(_round_up(c, LANE) for c in couts)

        # Fold ConvTranspose weights to padded (9*Cin, Cout_p) bf16 matrices once.
        self.w_mats = [
            _convT_to_matrix(init_wt(ks[l], cins[l], couts[l]), self.couts_p[l])
            for l in range(4)
        ]
        # BatchNorm2d default init: gamma=1, beta=0 (zero-padded to Cout_p).
        self.gammas_p = [
            jnp.pad(jnp.ones((couts[l],), jnp.float32), (0, self.couts_p[l] - couts[l]))
            for l in range(3)
        ]
        self.betas_p = [jnp.zeros((self.couts_p[l],), jnp.float32) for l in range(3)]
        # NOTE: all ConvTranspose2d layers in the spec use bias=False -> no bias terms.
        # TODO(synk): BatchNorm running_mean/running_var buffer updates (training-mode
        # side effect) are not materialized.

    def __call__(self, x_nchw):
        x = jnp.transpose(x_nchw, (0, 2, 3, 1)).astype(jnp.bfloat16)   # NHWC, bf16
        n, h, w, _ = x.shape
        m = n * h * w

        for l in range(3):
            col = _im2col(x)                                           # (M, 9*Cin) bf16
            act = _conv_bn_relu(col, self.w_mats[l], self.gammas_p[l],
                                self.betas_p[l], m, self.couts[l])
            x = act.reshape(n, h, w, self.couts[l])                    # bf16
        col = _im2col(x)
        y = _conv_sigmoid(col, self.w_mats[3], m, self.couts[3])       # f32
        out = y.reshape(n, h, w, self.couts[3])
        return jnp.transpose(out, (0, 3, 1, 2))                        # NCHW, f32


# -------------------------------------------------------- plain-JAX check ---
def _reference_forward(model, x_nchw, eps=1e-5):
    """Plain-JAX forward mirroring the kernel's bf16-input / f32-accumulate path."""
    x = jnp.transpose(x_nchw, (0, 2, 3, 1)).astype(jnp.bfloat16)
    n, h, w, _ = x.shape

    for l in range(3):
        c = model.couts[l]
        w_mat = model.w_mats[l][:, :c]
        g = model.gammas_p[l][:c]
        b = model.betas_p[l][:c]
        y = jnp.dot(_im2col(x), w_mat, preferred_element_type=jnp.float32)
        mean = jnp.mean(y, axis=0, keepdims=True)
        var = jnp.mean((y - mean) ** 2, axis=0, keepdims=True)   # two-pass, biased
        act = jnp.maximum((y - mean) / jnp.sqrt(var + eps) * g[None, :] + b[None, :], 0.0)
        x = act.astype(jnp.bfloat16).reshape(n, h, w, c)

    c = model.couts[3]
    y = jnp.dot(_im2col(x), model.w_mats[3][:, :c], preferred_element_type=jnp.float32)
    out = jax.nn.sigmoid(y).reshape(n, h, w, c)
    return jnp.transpose(out, (0, 3, 1, 2))


# ------------------------------------------------------------------- main ---
if __name__ == "__main__":
    key = jax.random.PRNGKey(0)
    kparam, kx = jax.random.split(key)

    inputsize, hiddensize, outputsize = 4, 4, 3
    batch, spatial = 4, 16          # M = batch*spatial^2 = 1024 -> 2 row tiles of TM=512

    model = GeneratorPallas(inputsize, hiddensize, outputsize, kparam)
    x = jax.random.normal(kx, (batch, inputsize, spatial, spatial), jnp.float32)  # NCHW

    out = jax.block_until_ready(model(x))
    assert out.shape == (batch, outputsize, spatial, spatial), out.shape

    ref = _reference_forward(model, x)
    max_err = float(jnp.max(jnp.abs(out - ref)))
    assert max_err < 5e-3, f"mismatch vs reference: {max_err}"

    print("KERNEL_OK")
</pallas_src>

<mosaic_0001>
module attributes {stable_mosaic.version = 11 : i64} {
  func.func @_matmul_stats_kernel(%arg0: i32, %arg1: memref<512x36xbf16, #tpu.memory_space<vmem>>, %arg2: memref<36x128xbf16, #tpu.memory_space<vmem>>, %arg3: memref<512x128xf32, #tpu.memory_space<vmem>>, %arg4: memref<1x1x128xf32, #tpu.memory_space<vmem>>, %arg5: memref<1x1x128xf32, #tpu.memory_space<vmem>>) attributes {dimension_semantics = [#tpu.dimension_semantics<parallel>], iteration_bounds = array<i64: 2>, scalar_prefetch = 0 : i64, scratch_operands = 0 : i64, tpu.core_type = #tpu.core_type<tc>, window_params = [{transform_indices = @transform_0, window_bounds = array<i64: 512, 36>}, {pipeline_mode = #tpu.pipeline_mode<synchronous>, transform_indices = @transform_1, window_bounds = array<i64: 36, 128>}, {transform_indices = @transform_2, window_bounds = array<i64: 512, 128>}, {transform_indices = @transform_3, window_bounds = array<i64: 1, 1, 128>}, {transform_indices = @transform_4, window_bounds = array<i64: 1, 1, 128>}]} {
    %c0 = arith.constant 0 : index
    %c0_0 = arith.constant 0 : index
    %0 = vector.load %arg1[%c0, %c0_0] : memref<512x36xbf16, #tpu.memory_space<vmem>>, vector<512x36xbf16>
    %c0_1 = arith.constant 0 : index
    %c0_2 = arith.constant 0 : index
    %1 = vector.load %arg2[%c0_1, %c0_2] : memref<36x128xbf16, #tpu.memory_space<vmem>>, vector<36x128xbf16>
    %cst = arith.constant dense<0.000000e+00> : vector<512x128xf32>
    %2 = tpu.matmul %0, %1, %cst {dimension_numbers = #tpu.dot_dimension_numbers<[1], [0], [0], [1], [0, 0, 1, 1], [], []>} : vector<512x36xbf16>, vector<36x128xbf16>, vector<512x128xf32> -> vector<512x128xf32>
    %c0_3 = arith.constant 0 : index
    %c0_4 = arith.constant 0 : index
    %3 = vector.load %arg3[%c0_3, %c0_4] : memref<512x128xf32, #tpu.memory_space<vmem>>, vector<512x128xf32>
    tpu.vector_store %arg3[%c0_3, %c0_4], %2 {strides = array<i32>} : memref<512x128xf32, #tpu.memory_space<vmem>>, vector<512x128xf32>,
    %cst_5 = arith.constant dense<0.000000e+00> : vector<128xf32>
    %4 = vector.multi_reduction <add>, %2, %cst_5 [0] : vector<512x128xf32> to vector<128xf32>
    %5 = vector.shape_cast %4 : vector<128xf32> to vector<1x128xf32>
    %c0_6 = arith.constant 0 : index
    %c0_7 = arith.constant 0 : index
    %c0_8 = arith.constant 0 : index
    %6 = vector.load %arg4[%c0_6, %c0_7, %c0_8] : memref<1x1x128xf32, #tpu.memory_space<vmem>>, vector<1x1x128xf32>
    %7 = vector.shape_cast %6 : vector<1x1x128xf32> to vector<1x128xf32>
    %8 = vector.shape_cast %5 : vector<1x128xf32> to vector<1x1x128xf32>
    tpu.vector_store %arg4[%c0_6, %c0_7, %c0_8], %8 {strides = array<i32>} : memref<1x1x128xf32, #tpu.memory_space<vmem>>, vector<1x1x128xf32>,
    %9 = arith.mulf %2, %2 : vector<512x128xf32>
    %cst_9 = arith.constant dense<0.000000e+00> : vector<128xf32>
    %10 = vector.multi_reduction <add>, %9, %cst_9 [0] : vector<512x128xf32> to vector<128xf32>
    %11 = vector.shape_cast %10 : vector<128xf32> to vector<1x128xf32>
    %c0_10 = arith.constant 0 : index
    %c0_11 = arith.constant 0 : index
    %c0_12 = arith.constant 0 : index
    %12 = vector.load %arg5[%c0_10, %c0_11, %c0_12] : memref<1x1x128xf32, #tpu.memory_space<vmem>>, vector<1x1x128xf32>
    %13 = vector.shape_cast %12 : vector<1x1x128xf32> to vector<1x128xf32>
    %14 = vector.shape_cast %11 : vector<1x128xf32> to vector<1x1x128xf32>
    tpu.vector_store %arg5[%c0_10, %c0_11, %c0_12], %14 {strides = array<i32>} : memref<1x1x128xf32, #tpu.memory_space<vmem>>, vector<1x1x128xf32>,
    return
  }
  func.func @transform_0(%arg0: i32) -> (i32, i32) {
    %c0_i32 = arith.constant 0 : i32
    %c0_i32_0 = arith.constant 0 : i32
    return %arg0, %c0_i32 : i32, i32
  }
  func.func @transform_1(%arg0: i32) -> (i32, i32) {
    %c0_i32 = arith.constant 0 : i32
    %c0_i32_0 = arith.constant 0 : i32
    %c0_i32_1 = arith.constant 0 : i32
    return %c0_i32, %c0_i32_0 : i32, i32
  }
  func.func @transform_2(%arg0: i32) -> (i32, i32) {
    %c0_i32 = arith.constant 0 : i32
    %c0_i32_0 = arith.constant 0 : i32
    return %arg0, %c0_i32 : i32, i32
  }
  func.func @transform_3(%arg0: i32) -> (i32, i32, i32) {
    %c0_i32 = arith.constant 0 : i32
    %c0_i32_0 = arith.constant 0 : i32
    %c0_i32_1 = arith.constant 0 : i32
    return %arg0, %c0_i32, %c0_i32_0 : i32, i32, i32
  }
  func.func @transform_4(%arg0: i32) -> (i32, i32, i32) {
    %c0_i32 = arith.constant 0 : i32
    %c0_i32_0 = arith.constant 0 : i32
    %c0_i32_1 = arith.constant 0 : i32
    return %arg0, %c0_i32, %c0_i32_0 : i32, i32, i32
  }
}

</mosaic_0001>

<llo_original>
// kernel: tpu_custom_call.1
$region0: #{tpu_custom_call.1}
  #allocation0 [shape = 'u32[]', space=smem, size = 0x4, offset = 0x4, fixed_abs, tag = 'smem constant byte address 0x4 - core index']
  #allocation1 [shape = 'u32[144,128]{1,0:T(1,128)}', space=vmem, size = 0x12000, scoped, tag = 'internal scratch']
  %s0 = inlined_call_operand.vmem [shape: bf16[1024,36], index: 0, kind: input, shape index: {}]
  %s1 = inlined_call_operand.vmem [shape: bf16[36,128], index: 1, kind: input, shape index: {}]
  %s2 = inlined_call_operand.hbm [shape: f32[1024,128], index: 2, kind: output, shape index: {0}]
  %s3 = inlined_call_operand.hbm [shape: f32[2,1,128], index: 3, kind: output, shape index: {1}]
  %s4 = inlined_call_operand.hbm [shape: f32[2,1,128], index: 4, kind: output, shape index: {2}]
  %5 = xla_tuple %s2, %s3, %s4
  %s6 = sld [smem:[#allocation0]]
  $region57: #{tpu_custom_call.1} parent=0
    _
  %s8 = ssub.s32 1, %s6
  %s9 = scalar_select 0, %s8, %s6
  $region1: #{tpu_custom_call.1} parent=0
    #allocation2 [shape = 'u8[524288]{0}', space=vmem, size = 0x80000, scoped, tag = 'output window, operand 0']
    #allocation3 [shape = 's32[2]{0}', space=sflag, size = 0x8, scoped, tag = 'scoped memory for tpu_custom_call.1']
    #allocation4 [shape = 'u8[1024]{0}', space=vmem, size = 0x400, scoped, tag = 'output window, operand 1']
    #allocation5 [shape = 's32[2]{0}', space=sflag, size = 0x8, scoped, tag = 'scoped memory for tpu_custom_call.1']
    #allocation6 [shape = 'u8[1024]{0}', space=vmem, size = 0x400, scoped, tag = 'output window, operand 2']
    %10 = vsyncpa [#allocation3], 0
    %s11 = scalar_lea.sflag [#allocation3], 1
    %12 = vsyncpa %s11, 0
    %13 = vsyncpa [#allocation5], 0
    %s14 = scalar_lea.sflag [#allocation5], 1
    %15 = vsyncpa %s14, 0
    loop: start=0, step=1, limit=4
    $region2: #{tpu_custom_call.1} parent=1 // loop_pre_header
      _
    $region3: #{tpu_custom_call.1} parent=1 // loop_header
      %s17 = sphi 0, %s21
      %p18 = scmp.ge.s32.totalorder %s17, 4
      %s27 = sphi 0, %s29
      %s30 = sphi 0, %s27
      %s31 = sphi 0, %s30
      %s47 = sphi 0, %s31
      %s51 = sphi 0, %s51
      %s53 = sphi 0, %s51
      %s54 = sphi 0, %s53
      %s68 = sphi 0, %s54
      %s74 = sphi 0, %s76
      %s77 = sphi 0, %s74
      %s78 = sphi 0, %s77
      %s94 = sphi 0, %s78
      %s100 = sphi 0, %s102
      %s103 = sphi 0, %s100
      %s104 = sphi 0, %s103
      %s120 = sphi 0, %s104
      %s126 = sphi 0, %s128
      %s129 = sphi 0, %s126
      %s130 = sphi 0, %s129
      %s146 = sphi 0, %s130
    $region4: #{tpu_custom_call.1} parent=1 // loop_header_branch
      %20 = sbr.rel (%p18) target = $region8
    $region5: #{tpu_custom_call.1} parent=1 // loop_body
      %s22 = ssub.s32 %s17, 1
      %s23 = ssub.s32 %s17, 2
      %s24 = sadd.s32 %s17, 1
      %s25 = ssub.s32 %s17, %s24
      %p26 = scmp.eq.s32.totalorder %s25, 0
      %s28 = sadd.s32 %s27, 1
      %s29 = scalar_select %p26, %s27, %s28
      %p32 = pneg %p26
      %p33 = scmp.eq.s32.totalorder %s17, 1
      %p34 = por %p32, %p33
      %p35 = scmp.ne.s32.totalorder %s27, %s30
      %p36 = scmp.eq.s32.totalorder %s17, 0
      %p37 = por %p35, %p36
      %p38 = scmp.ne.s32.totalorder %s27, %s30
      %p39 = scmp.eq.s32.totalorder %s22, 1
      %p40 = por %p38, %p39
      %p41 = scmp.ne.s32.totalorder %s30, %s31
      %p42 = scmp.eq.s32.totalorder %s22, 0
      %p43 = por %p41, %p42
      %p44 = scmp.ne.s32.totalorder %s30, %s31
      %p45 = scmp.eq.s32.totalorder %s23, 1
      %p46 = por %p44, %p45
      %p48 = scmp.ne.s32.totalorder %s31, %s47
      %p49 = scmp.eq.s32.totalorder %s23, 0
      %p50 = por %p48, %p49
      %s52 = sadd.s32 %s51, 1
      %p55 = scmp.eq.s32.totalorder %s17, 1
      %p56 = scmp.ne.s32.totalorder %s51, %s53
      %p57 = scmp.eq.s32.totalorder %s17, 0
      %p58 = por %p56, %p57
      %p59 = scmp.ne.s32.totalorder %s51, %s53
      %p60 = scmp.eq.s32.totalorder %s22, 1
      %p61 = por %p59, %p60
      %p62 = scmp.ne.s32.totalorder %s53, %s54
      %p63 = scmp.eq.s32.totalorder %s22, 0
      %p64 = por %p62, %p63
      %p65 = scmp.ne.s32.totalorder %s53, %s54
      %p66 = scmp.eq.s32.totalorder %s23, 1
      %p67 = por %p65, %p66
      %p69 = scmp.ne.s32.totalorder %s54, %s68
      %p70 = scmp.eq.s32.totalorder %s23, 0
      %p71 = por %p69, %p70
      %s72 = ssub.s32 %s17, %s24
      %p73 = scmp.eq.s32.totalorder %s72, 0
      %s75 = sadd.s32 %s74, 1
      %s76 = scalar_select %p73, %s74, %s75
      %p79 = pneg %p73
      %p80 = scmp.eq.s32.totalorder %s17, 1
      %p81 = por %p79, %p80
      %p82 = scmp.ne.s32.totalorder %s74, %s77
      %p83 = scmp.eq.s32.totalorder %s17, 0
      %p84 = por %p82, %p83
      %p85 = scmp.ne.s32.totalorder %s74, %s77
      %p86 = scmp.eq.s32.totalorder %s22, 1
      %p87 = por %p85, %p86
      %p88 = scmp.ne.s32.totalorder %s77, %s78
      %p89 = scmp.eq.s32.totalorder %s22, 0
      %p90 = por %p88, %p89
      %p91 = scmp.ne.s32.totalorder %s77, %s78
      %p92 = scmp.eq.s32.totalorder %s23, 1
      %p93 = por %p91, %p92
      %p95 = scmp.ne.s32.totalorder %s78, %s94
      %p96 = scmp.eq.s32.totalorder %s23, 0
      %p97 = por %p95, %p96
      %s98 = ssub.s32 %s17, %s24
      %p99 = scmp.eq.s32.totalorder %s98, 0
      %s101 = sadd.s32 %s100, 1
      %s102 = scalar_select %p99, %s100, %s101
      %p105 = pneg %p99
      %p106 = scmp.eq.s32.totalorder %s17, 1
      %p107 = por %p105, %p106
      %p108 = scmp.ne.s32.totalorder %s100, %s103
      %p109 = scmp.eq.s32.totalorder %s17, 0
      %p110 = por %p108, %p109
      %p111 = scmp.ne.s32.totalorder %s100, %s103
      %p112 = scmp.eq.s32.totalorder %s22, 1
      %p113 = por %p111, %p112
      %p114 = scmp.ne.s32.totalorder %s103, %s104
      %p115 = scmp.eq.s32.totalorder %s22, 0
      %p116 = por %p114, %p115
      %p117 = scmp.ne.s32.totalorder %s103, %s104
      %p118 = scmp.eq.s32.totalorder %s23, 1
      %p119 = por %p117, %p118
      %p121 = scmp.ne.s32.totalorder %s104, %s120
      %p122 = scmp.eq.s32.totalorder %s23, 0
      %p123 = por %p121, %p122
      %s124 = ssub.s32 %s17, %s24
      %p125 = scmp.eq.s32.totalorder %s124, 0
      %s127 = sadd.s32 %s126, 1
      %s128 = scalar_select %p125, %s126, %s127
      %p131 = pneg %p125
      %p132 = scmp.eq.s32.totalorder %s17, 1
      %p133 = por %p131, %p132
      %p134 = scmp.ne.s32.totalorder %s126, %s129
      %p135 = scmp.eq.s32.totalorder %s17, 0
      %p136 = por %p134, %p135
      %p137 = scmp.ne.s32.totalorder %s126, %s129
      %p138 = scmp.eq.s32.totalorder %s22, 1
      %p139 = por %p137, %p138
      %p140 = scmp.ne.s32.totalorder %s129, %s130
      %p141 = scmp.eq.s32.totalorder %s22, 0
      %p142 = por %p140, %p141
      %p143 = scmp.ne.s32.totalorder %s129, %s130
      %p144 = scmp.eq.s32.totalorder %s23, 1
      %p145 = por %p143, %p144
      %p147 = scmp.ne.s32.totalorder %s130, %s146
      %p148 = scmp.eq.s32.totalorder %s23, 0
      %p149 = por %p147, %p148
      %p150 = scmp.le.s32.totalorder 1, %s17
      %p151 = scmp.lt.s32.totalorder %s17, 3
      %p152 = pnand %p150, %p151
      %p153 = pneg %p152
      // Predicated region
      $region9: #{tpu_custom_call.1} parent=5 // pred_check
        _
      $region10: #{tpu_custom_call.1} parent=5 // pred_check_branch
        %155 = sbr.rel (%p152) target = $region12
      $region11: #{tpu_custom_call.1} parent=5 // pred_region
        %s156 = ssub.s32 %s17, 1
        // Predicated region
        $region13: #{tpu_custom_call.1} parent=11 // pred_check
          %p157 = pneg %p64
        $region14: #{tpu_custom_call.1} parent=11 // pred_check_branch
          %159 = sbr.rel (%p157) target = $region16
        $region15: #{tpu_custom_call.1} parent=11 // pred_region
          _
        $region16: #{tpu_custom_call.1} parent=11 // pred_fallthru
          _
      $region12: #{tpu_custom_call.1} parent=5 // pred_fallthru
        _
      %p160 = scmp.lt.s32.totalorder %s17, 2
      // Predicated region
      $region17: #{tpu_custom_call.1} parent=5 // pred_check
        %p161 = pneg %p160
      $region18: #{tpu_custom_call.1} parent=5 // pred_check_branch
        %163 = sbr.rel (%p161) target = $region20
      $region19: #{tpu_custom_call.1} parent=5 // pred_region
        // Predicated region
        $region21: #{tpu_custom_call.1} parent=19 // pred_check
          %p164 = pneg %p37
        $region22: #{tpu_custom_call.1} parent=19 // pred_check_branch
          %166 = sbr.rel (%p164) target = $region24
        $region23: #{tpu_custom_call.1} parent=19 // pred_region
          %s167 = smul.u32 64, %s17
          %p168 = scmp.lt.s32.totalorder %s167, 127
          %s169 = scalar_select %p168, %s167, 127
          %s170 = smul.addr %s169, 4
          %s171 = scalar_lea.vmem %s0, %s170
          %s172 = smul.u32 64, %s17
        $region24: #{tpu_custom_call.1} parent=19 // pred_fallthru
          _
      $region20: #{tpu_custom_call.1} parent=5 // pred_fallthru
        _
      %p173 = scmp.le.s32.totalorder 1, %s17
      %p174 = scmp.lt.s32.totalorder %s17, 3
      %p175 = pnand %p173, %p174
      %p176 = pneg %p175
      // Predicated region
      $region25: #{tpu_custom_call.1} parent=5 // pred_check
        _
      $region26: #{tpu_custom_call.1} parent=5 // pred_check_branch
        %178 = sbr.rel (%p175) target = $region28
      $region27: #{tpu_custom_call.1} parent=5 // pred_region
        %s179 = ssub.s32 %s17, 1
        %s180 = smul.u32 64, %s22
        %p181 = scmp.lt.s32.totalorder %s180, 127
        %s182 = scalar_select %p181, %s180, 127
        %s183 = smul.addr %s182, 4
        %s184 = scalar_lea.vmem %s0, %s183
        %p185 = pneg %p43
        %p186 = pneg %p40
        %p187 = pneg %p64
        %p188 = pneg %p61
        %p189 = pneg %p90
        %p190 = pneg %p87
        %s191 = sand.u32 %s77, 1
        %s192 = scalar_lea.sflag [#allocation3], %s191
        %s193 = sand.u32 %s77, 1
        %s194 = smul.addr %s193, 512
        %s195 = scalar_lea.vmem [#allocation2], %s194
        %p196 = pneg %p116
        %p197 = pneg %p113
        %s198 = sand.u32 %s22, 1
        %s199 = scalar_lea.sflag [#allocation5], %s198
        %s200 = sand.u32 %s103, 1
        %s201 = scalar_lea.vmem [#allocation4], %s200
        %p202 = pneg %p142
        %p203 = pneg %p139
        %s204 = sand.u32 %s22, 1
        %s205 = scalar_lea.sflag [#allocation5], %s204
        %s206 = sand.u32 %s129, 1
        %s207 = scalar_lea.vmem [#allocation6], %s206
        %s208 = smul.u32 64, %s22
        %p209 = scmp.lt.s32.totalorder %s208, 127
        %s210 = scalar_select %p209, %s208, 127
        %s211 = smul.addr %s210, 4
        %s212 = scalar_lea.vmem %s0, %s211
        %s213 = smul.u32 64, %s22
        %s214 = smul.u32 64, %s22
        %v216 = vld [vmem:[%s212] sm:$0xf]
        %v217 = vld [vmem:[%s212 + $0x4] sm:$0xf]
        %v218 = vld [vmem:[%s212 + $0x8] sm:$0xf]
        %v219 = vld [vmem:[%s212 + $0xc] sm:$0xf]
        %v220 = vld [vmem:[%s212 + $0x10] sm:$0xf]
        %v221 = vld [vmem:[%s212 + $0x14] sm:$0xf]
        %v222 = vld [vmem:[%s212 + $0x18] sm:$0xf]
        %v223 = vld [vmem:[%s212 + $0x1c] sm:$0xf]
        %v224 = vld [vmem:[%s212 + $0x20] sm:$0xf]
        %v225 = vld [vmem:[%s212 + $0x24] sm:$0xf]
        %v226 = vld [vmem:[%s212 + $0x28] sm:$0xf]
        %v227 = vld [vmem:[%s212 + $0x2c] sm:$0xf]
        %v228 = vld [vmem:[%s212 + $0x30] sm:$0xf]
        %v229 = vld [vmem:[%s212 + $0x34] sm:$0xf]
        %v230 = vld [vmem:[%s212 + $0x38] sm:$0xf]
        %v231 = vld [vmem:[%s212 + $0x3c] sm:$0xf]
        %v232 = vld [vmem:[%s212 + $0x40] sm:$0xf]
        %v233 = vld [vmem:[%s212 + $0x44] sm:$0xf]
        %v234 = vld [vmem:[%s212 + $0x48] sm:$0xf]
        %v235 = vld [vmem:[%s212 + $0x4c] sm:$0xf]
        %v236 = vld [vmem:[%s212 + $0x50] sm:$0xf]
        %v237 = vld [vmem:[%s212 + $0x54] sm:$0xf]
        %v238 = vld [vmem:[%s212 + $0x58] sm:$0xf]
        %v239 = vld [vmem:[%s212 + $0x5c] sm:$0xf]
        %v240 = vld [vmem:[%s212 + $0x60] sm:$0xf]
        %v241 = vld [vmem:[%s212 + $0x64] sm:$0xf]
        %v242 = vld [vmem:[%s212 + $0x68] sm:$0xf]
        %v243 = vld [vmem:[%s212 + $0x6c] sm:$0xf]
        %v244 = vld [vmem:[%s212 + $0x70] sm:$0xf]
        %v245 = vld [vmem:[%s212 + $0x74] sm:$0xf]
        %v246 = vld [vmem:[%s212 + $0x78] sm:$0xf]
        %v247 = vld [vmem:[%s212 + $0x7c] sm:$0xf]
        %v248 = vld [vmem:[%s212 + $0x80] sm:$0xf]
        %v249 = vld [vmem:[%s212 + $0x84] sm:$0xf]
        %v250 = vld [vmem:[%s212 + $0x88] sm:$0xf]
        %v251 = vld [vmem:[%s212 + $0x8c] sm:$0xf]
        %v252 = vld [vmem:[%s212 + $0x90] sm:$0xf]
        %v253 = vld [vmem:[%s212 + $0x94] sm:$0xf]
        %v254 = vld [vmem:[%s212 + $0x98] sm:$0xf]
        %v255 = vld [vmem:[%s212 + $0x9c] sm:$0xf]
        %v256 = vld [vmem:[%s212 + $0xa0] sm:$0xf]
        %v257 = vld [vmem:[%s212 + $0xa4] sm:$0xf]
        %v258 = vld [vmem:[%s212 + $0xa8] sm:$0xf]
        %v259 = vld [vmem:[%s212 + $0xac] sm:$0xf]
        %v260 = vld [vmem:[%s212 + $0xb0] sm:$0xf]
        %v261 = vld [vmem:[%s212 + $0xb4] sm:$0xf]
        %v262 = vld [vmem:[%s212 + $0xb8] sm:$0xf]
        %v263 = vld [vmem:[%s212 + $0xbc] sm:$0xf]
        %v264 = vld [vmem:[%s212 + $0xc0] sm:$0xf]
        %v265 = vld [vmem:[%s212 + $0xc4] sm:$0xf]
        %v266 = vld [vmem:[%s212 + $0xc8] sm:$0xf]
        %v267 = vld [vmem:[%s212 + $0xcc] sm:$0xf]
        %v268 = vld [vmem:[%s212 + $0xd0] sm:$0xf]
        %v269 = vld [vmem:[%s212 + $0xd4] sm:$0xf]
        %v270 = vld [vmem:[%s212 + $0xd8] sm:$0xf]
        %v271 = vld [vmem:[%s212 + $0xdc] sm:$0xf]
        %v272 = vld [vmem:[%s212 + $0xe0] sm:$0xf]
        %v273 = vld [vmem:[%s212 + $0xe4] sm:$0xf]
        %v274 = vld [vmem:[%s212 + $0xe8] sm:$0xf]
        %v275 = vld [vmem:[%s212 + $0xec] sm:$0xf]
        %v276 = vld [vmem:[%s212 + $0xf0] sm:$0xf]
        %v277 = vld [vmem:[%s212 + $0xf4] sm:$0xf]
        %v278 = vld [vmem:[%s212 + $0xf8] sm:$0xf]
        %v279 = vld [vmem:[%s212 + $0xfc] sm:$0xf]
        %v280 = vld [vmem:[%s1] sm:$0xf]
        %v281 = vld [vmem:[%s1 + $0x4] sm:$0xf]
        %v282 = vld [vmem:[%s1 + $0x8] sm:$0xf]
        %v283 = vld [vmem:[%s1 + $0xc] sm:$0xf]
        %v284 = vld [vmem:[%s1 + $0x10] sm:$0x3]
        %v349 = vunpack.c.l.b16 %v216
        %v350 = vunpack.c.l.b16 %v217
        %v351 = vunpack.c.l.b16 %v218
        %v352 = vunpack.c.l.b16 %v219
        %v353 = vunpack.c.l.b16 %v220
        %v354 = vunpack.c.l.b16 %v221
        %v355 = vunpack.c.l.b16 %v222
        %v356 = vunpack.c.l.b16 %v223
        %v357 = vunpack.c.l.b16 %v224
        %v358 = vunpack.c.l.b16 %v225
        %v359 = vunpack.c.l.b16 %v226
        %v360 = vunpack.c.l.b16 %v227
        %v361 = vunpack.c.l.b16 %v228
        %v362 = vunpack.c.l.b16 %v229
        %v363 = vunpack.c.l.b16 %v230
        %v364 = vunpack.c.l.b16 %v231
        %v365 = vunpack.c.l.b16 %v232
        %v366 = vunpack.c.l.b16 %v233
        %v367 = vunpack.c.l.b16 %v234
        %v368 = vunpack.c.l.b16 %v235
        %v369 = vunpack.c.l.b16 %v236
        %v370 = vunpack.c.l.b16 %v237
        %v371 = vunpack.c.l.b16 %v238
        %v372 = vunpack.c.l.b16 %v239
        %v373 = vunpack.c.l.b16 %v240
        %v374 = vunpack.c.l.b16 %v241
        %v375 = vunpack.c.l.b16 %v242
        %v376 = vunpack.c.l.b16 %v243
        %v377 = vunpack.c.l.b16 %v244
        %v378 = vunpack.c.l.b16 %v245
        %v379 = vunpack.c.l.b16 %v246
        %v380 = vunpack.c.l.b16 %v247
        %v381 = vunpack.c.l.b16 %v248
        %v382 = vunpack.c.l.b16 %v249
        %v383 = vunpack.c.l.b16 %v250
        %v384 = vunpack.c.l.b16 %v251
        %v385 = vunpack.c.l.b16 %v252
        %v386 = vunpack.c.l.b16 %v253
        %v387 = vunpack.c.l.b16 %v254
        %v388 = vunpack.c.l.b16 %v255
        %v389 = vunpack.c.l.b16 %v256
        %v390 = vunpack.c.l.b16 %v257
        %v391 = vunpack.c.l.b16 %v258
        %v392 = vunpack.c.l.b16 %v259
        %v393 = vunpack.c.l.b16 %v260
        %v394 = vunpack.c.l.b16 %v261
        %v395 = vunpack.c.l.b16 %v262
        %v396 = vunpack.c.l.b16 %v263
        %v397 = vunpack.c.l.b16 %v264
        %v398 = vunpack.c.l.b16 %v265
        %v399 = vunpack.c.l.b16 %v266
        %v400 = vunpack.c.l.b16 %v267
        %v401 = vunpack.c.l.b16 %v268
        %v402 = vunpack.c.l.b16 %v269
        %v403 = vunpack.c.l.b16 %v270
        %v404 = vunpack.c.l.b16 %v271
        %v405 = vunpack.c.l.b16 %v272
        %v406 = vunpack.c.l.b16 %v273
        %v407 = vunpack.c.l.b16 %v274
        %v408 = vunpack.c.l.b16 %v275
        %v409 = vunpack.c.l.b16 %v276
        %v410 = vunpack.c.l.b16 %v277
        %v411 = vunpack.c.l.b16 %v278
        %v412 = vunpack.c.l.b16 %v279
        %v413 = vpack.c.b16 %v350, %v349
        %v414 = vpack.c.b16 %v352, %v351
        %v415 = vpack.c.b16 %v354, %v353
        %v416 = vpack.c.b16 %v356, %v355
        %v417 = vpack.c.b16 %v358, %v357
        %v418 = vpack.c.b16 %v360, %v359
        %v419 = vpack.c.b16 %v362, %v361
        %v420 = vpack.c.b16 %v364, %v363
        %v421 = vpack.c.b16 %v366, %v365
        %v422 = vpack.c.b16 %v368, %v367
        %v423 = vpack.c.b16 %v370, %v369
        %v424 = vpack.c.b16 %v372, %v371
        %v425 = vpack.c.b16 %v374, %v373
        %v426 = vpack.c.b16 %v376, %v375
        %v427 = vpack.c.b16 %v378, %v377
        %v428 = vpack.c.b16 %v380, %v379
        %v429 = vpack.c.b16 %v382, %v381
        %v430 = vpack.c.b16 %v384, %v383
        %v431 = vpack.c.b16 %v386, %v385
        %v432 = vpack.c.b16 %v388, %v387
        %v433 = vpack.c.b16 %v390, %v389
        %v434 = vpack.c.b16 %v392, %v391
        %v435 = vpack.c.b16 %v394, %v393
        %v436 = vpack.c.b16 %v396, %v395
        %v437 = vpack.c.b16 %v398, %v397
        %v438 = vpack.c.b16 %v400, %v399
        %v439 = vpack.c.b16 %v402, %v401
        %v440 = vpack.c.b16 %v404, %v403
        %v441 = vpack.c.b16 %v406, %v405
        %v442 = vpack.c.b16 %v408, %v407
        %v443 = vpack.c.b16 %v410, %v409
        %v444 = vpack.c.b16 %v412, %v411
        %v450 = vunpack.c.l.b16 %v280
        %v451 = vunpack.c.l.b16 %v281
        %v452 = vunpack.c.l.b16 %v282
        %v453 = vunpack.c.l.b16 %v283
        %v454 = vunpack.c.l.b16 %v284
        %v455 = vpack.c.b16 %v451, %v450
        %v456 = vpack.c.b16 %v453, %v452
        %v457 = vpack.c.b16 %v454, %v454
        %vm460 = vcmask 293888
        %v462 = vsel %vm460, %v413, 0
        %v465 = vsel %vm460, %v414, 0
        %v468 = vsel %vm460, %v415, 0
        %v471 = vsel %vm460, %v416, 0
        %v474 = vsel %vm460, %v417, 0
        %v477 = vsel %vm460, %v418, 0
        %v480 = vsel %vm460, %v419, 0
        %v483 = vsel %vm460, %v420, 0
        %v486 = vsel %vm460, %v421, 0
        %v489 = vsel %vm460, %v422, 0
        %v492 = vsel %vm460, %v423, 0
        %v495 = vsel %vm460, %v424, 0
        %v498 = vsel %vm460, %v425, 0
        %v501 = vsel %vm460, %v426, 0
        %v504 = vsel %vm460, %v427, 0
        %v507 = vsel %vm460, %v428, 0
        %v510 = vsel %vm460, %v429, 0
        %v513 = vsel %vm460, %v430, 0
        %v516 = vsel %vm460, %v431, 0
        %v519 = vsel %vm460, %v432, 0
        %v522 = vsel %vm460, %v433, 0
        %v525 = vsel %vm460, %v434, 0
        %v528 = vsel %vm460, %v435, 0
        %v531 = vsel %vm460, %v436, 0
        %v534 = vsel %vm460, %v437, 0
        %v537 = vsel %vm460, %v438, 0
        %v540 = vsel %vm460, %v439, 0
        %v543 = vsel %vm460, %v440, 0
        %v546 = vsel %vm460, %v441, 0
        %v549 = vsel %vm460, %v442, 0
        %v552 = vsel %vm460, %v443, 0
        %v555 = vsel %vm460, %v444, 0
        %vm557 = vcmask 1041408
        %v559 = vsel %vm557, %v457, 0
        %561 = vmatprep.subr.bf16.mxu0 0
        %562 = vmatpush1.bf16.msra.mxu0 %v455
        %563 = vmatprep.subr.bf16.mxu0 0
        %564 = vmatpush1.bf16.msra.mxu0 %v456
        %565 = vmatprep.subr.bf16.mxu0 0
        %566 = vmatpush1.bf16.msra.mxu0 %v559
        %567 = vmatprep.subr.bf16.mxu0 0
        %568 = vmatpush1.bf16.msra.mxu0 0
        %569 = vmatprep.subr.bf16.mxu0 0
        %570 = vmatpush1.bf16.msra.mxu0 0
        %571 = vmatprep.subr.bf16.mxu0 0
        %572 = vmatpush1.bf16.msra.mxu0 0
        %573 = vmatprep.subr.bf16.mxu0 0
        %574 = vmatpush1.bf16.msra.mxu0 0
        %575 = vmatprep.subr.bf16.mxu0 0
        %576 = vmatpush1.bf16.msra.mxu0 0
        %577 = vmatprep.subr.bf16.mxu0 0
        %578 = vmatpush1.bf16.msra.mxu0 0
        %579 = vmatprep.subr.bf16.mxu0 0
        %580 = vmatpush1.bf16.msra.mxu0 0
        %581 = vmatprep.subr.bf16.mxu0 0
        %582 = vmatpush1.bf16.msra.mxu0 0
        %583 = vmatprep.subr.bf16.mxu0 0
        %584 = vmatpush1.bf16.msra.mxu0 0
        %585 = vmatprep.subr.bf16.mxu0 0
        %586 = vmatpush1.bf16.msra.mxu0 0
        %587 = vmatprep.subr.bf16.mxu0 0
        %588 = vmatpush1.bf16.msra.mxu0 0
        %589 = vmatprep.subr.bf16.mxu0 0
        %590 = vmatpush1.bf16.msra.mxu0 0
        %591 = vmatprep.subr.bf16.mxu0 0
        %592 = vmatpush1.bf16.msra.mxu0 0
        %593 = vmatprep.mubr.bf16.mxu0 0
        %594 = vmatmul.mubr.bf16.gmra.mrb[0].mxu0 %v462
        %v595 = vpop.f32.mrb[0].mxu0
        %v596 = vadd.f32 0.0, %v595
        %v597 = vpop.f32.mrb[0].mxu0
        %v598 = vpop.f32.mrb[0].mxu0
        %v599 = vadd.f32 0.0, %v598
        %v600 = vpop.f32.mrb[0].mxu0
        %601 = vmatprep.mubr.bf16.mxu0 0
        %602 = vmatmul.mubr.bf16.gmra.mrb[0].mxu0 %v465
        %v603 = vpop.f32.mrb[0].mxu0
        %v604 = vadd.f32 0.0, %v603
        %v605 = vpop.f32.mrb[0].mxu0
        %v606 = vpop.f32.mrb[0].mxu0
        %v607 = vadd.f32 0.0, %v606
        %v608 = vpop.f32.mrb[0].mxu0
        %609 = vmatprep.mubr.bf16.mxu0 0
        %610 = vmatmul.mubr.bf16.gmra.mrb[0].mxu0 %v468
        %v611 = vpop.f32.mrb[0].mxu0
        %v612 = vadd.f32 0.0, %v611
        %v613 = vpop.f32.mrb[0].mxu0
        %v614 = vpop.f32.mrb[0].mxu0
        %v615 = vadd.f32 0.0, %v614
        %v616 = vpop.f32.mrb[0].mxu0
        %617 = vmatprep.mubr.bf16.mxu0 0
        %618 = vmatmul.mubr.bf16.gmra.mrb[0].mxu0 %v471
        %v619 = vpop.f32.mrb[0].mxu0
        %v620 = vadd.f32 0.0, %v619
        %v621 = vpop.f32.mrb[0].mxu0
        %v622 = vpop.f32.mrb[0].mxu0
        %v623 = vadd.f32 0.0, %v622
        %v624 = vpop.f32.mrb[0].mxu0
        %625 = vmatprep.mubr.bf16.mxu0 0
        %626 = vmatmul.mubr.bf16.gmra.mrb[0].mxu0 %v474
        %v627 = vpop.f32.mrb[0].mxu0
        %v628 = vadd.f32 0.0, %v627
        %v629 = vpop.f32.mrb[0].mxu0
        %v630 = vpop.f32.mrb[0].mxu0
        %v631 = vadd.f32 0.0, %v630
        %v632 = vpop.f32.mrb[0].mxu0
        %633 = vmatprep.mubr.bf16.mxu0 0
        %634 = vmatmul.mubr.bf16.gmra.mrb[0].mxu0 %v477
        %v635 = vpop.f32.mrb[0].mxu0
        %v636 = vadd.f32 0.0, %v635
        %v637 = vpop.f32.mrb[0].mxu0
        %v638 = vpop.f32.mrb[0].mxu0
        %v639 = vadd.f32 0.0, %v638
        %v640 = vpop.f32.mrb[0].mxu0
        %641 = vmatprep.mubr.bf16.mxu0 0
        %642 = vmatmul.mubr.bf16.gmra.mrb[0].mxu0 %v480
        %v643 = vpop.f32.mrb[0].mxu0
        %v644 = vadd.f32 0.0, %v643
        %v645 = vpop.f32.mrb[0].mxu0
        %v646 = vpop.f32.mrb[0].mxu0
        %v647 = vadd.f32 0.0, %v646
        %v648 = vpop.f32.mrb[0].mxu0
        %649 = vmatprep.mubr.bf16.mxu0 0
        %650 = vmatmul.mubr.bf16.gmra.mrb[0].mxu0 %v483
        %v651 = vpop.f32.mrb[0].mxu0
        %v652 = vadd.f32 0.0, %v651
        %v653 = vpop.f32.mrb[0].mxu0
        %v654 = vpop.f32.mrb[0].mxu0
        %v655 = vadd.f32 0.0, %v654
        %v656 = vpop.f32.mrb[0].mxu0
        %657 = vmatprep.mubr.bf16.mxu0 0
        %658 = vmatmul.mubr.bf16.gmra.mrb[0].mxu0 %v486
        %v659 = vpop.f32.mrb[0].mxu0
        %v660 = vadd.f32 0.0, %v659
        %v661 = vpop.f32.mrb[0].mxu0
        %v662 = vpop.f32.mrb[0].mxu0
        %v663 = vadd.f32 0.0, %v662
        %v664 = vpop.f32.mrb[0].mxu0
        %665 = vmatprep.mubr.bf16.mxu0 0
        %666 = vmatmul.mubr.bf16.gmra.mrb[0].mxu0 %v489
        %v667 = vpop.f32.mrb[0].mxu0
        %v668 = vadd.f32 0.0, %v667
        %v669 = vpop.f32.mrb[0].mxu0
        %v670 = vpop.f32.mrb[0].mxu0
        %v671 = vadd.f32 0.0, %v670
        %v672 = vpop.f32.mrb[0].mxu0
        %673 = vmatprep.mubr.bf16.mxu0 0
        %674 = vmatmul.mubr.bf16.gmra.mrb[0].mxu0 %v492
        %v675 = vpop.f32.mrb[0].mxu0
        %v676 = vadd.f32 0.0, %v675
        %v677 = vpop.f32.mrb[0].mxu0
        %v678 = vpop.f32.mrb[0].mxu0
        %v679 = vadd.f32 0.0, %v678
        %v680 = vpop.f32.mrb[0].mxu0
        %681 = vmatprep.mubr.bf16.mxu0 0
        %682 = vmatmul.mubr.bf16.gmra.mrb[0].mxu0 %v495
        %v683 = vpop.f32.mrb[0].mxu0
        %v684 = vadd.f32 0.0, %v683
        %v685 = vpop.f32.mrb[0].mxu0
        %v686 = vpop.f32.mrb[0].mxu0
        %v687 = vadd.f32 0.0, %v686
        %v688 = vpop.f32.mrb[0].mxu0
        %689 = vmatprep.mubr.bf16.mxu0 0
        %690 = vmatmul.mubr.bf16.gmra.mrb[0].mxu0 %v498
        %v691 = vpop.f32.mrb[0].mxu0
        %v692 = vadd.f32 0.0, %v691
        %v693 = vpop.f32.mrb[0].mxu0
        %v694 = vpop.f32.mrb[0].mxu0
        %v695 = vadd.f32 0.0, %v694
        %v696 = vpop.f32.mrb[0].mxu0
        %697 = vmatprep.mubr.bf16.mxu0 0
        %698 = vmatmul.mubr.bf16.gmra.mrb[0].mxu0 %v501
        %v699 = vpop.f32.mrb[0].mxu0
        %v700 = vadd.f32 0.0, %v699
        %v701 = vpop.f32.mrb[0].mxu0
        %v702 = vpop.f32.mrb[0].mxu0
        %v703 = vadd.f32 0.0, %v702
        %v704 = vpop.f32.mrb[0].mxu0
        %705 = vmatprep.mubr.bf16.mxu0 0
        %706 = vmatmul.mubr.bf16.gmra.mrb[0].mxu0 %v504
        %v707 = vpop.f32.mrb[0].mxu0
        %v708 = vadd.f32 0.0, %v707
        %v709 = vpop.f32.mrb[0].mxu0
        %v710 = vpop.f32.mrb[0].mxu0
        %v711 = vadd.f32 0.0, %v710
        %v712 = vpop.f32.mrb[0].mxu0
        %713 = vmatprep.mubr.bf16.mxu0 0
        %714 = vmatmul.mubr.bf16.gmra.mrb[0].mxu0 %v507
        %v715 = vpop.f32.mrb[0].mxu0
        %v716 = vadd.f32 0.0, %v715
        %v717 = vpop.f32.mrb[0].mxu0
        %v718 = vpop.f32.mrb[0].mxu0
        %v719 = vadd.f32 0.0, %v718
        %v720 = vpop.f32.mrb[0].mxu0
        %721 = vmatprep.mubr.bf16.mxu0 0
        %722 = vmatmul.mubr.bf16.gmra.mrb[0].mxu0 %v510
        %v723 = vpop.f32.mrb[0].mxu0
        %v724 = vadd.f32 0.0, %v723
        %v725 = vpop.f32.mrb[0].mxu0
        %v726 = vpop.f32.mrb[0].mxu0
        %v727 = vadd.f32 0.0, %v726
        %v728 = vpop.f32.mrb[0].mxu0
        %729 = vmatprep.mubr.bf16.mxu0 0
        %730 = vmatmul.mubr.bf16.gmra.mrb[0].mxu0 %v513
        %v731 = vpop.f32.mrb[0].mxu0
        %v732 = vadd.f32 0.0, %v731
        %v733 = vpop.f32.mrb[0].mxu0
        %v734 = vpop.f32.mrb[0].mxu0
        %v735 = vadd.f32 0.0, %v734
        %v736 = vpop.f32.mrb[0].mxu0
        %737 = vmatprep.mubr.bf16.mxu0 0
        %738 = vmatmul.mubr.bf16.gmra.mrb[0].mxu0 %v516
        %v739 = vpop.f32.mrb[0].mxu0
        %v740 = vadd.f32 0.0, %v739
        %v741 = vpop.f32.mrb[0].mxu0
        %v742 = vpop.f32.mrb[0].mxu0
        %v743 = vadd.f32 0.0, %v742
        %v744 = vpop.f32.mrb[0].mxu0
        %745 = vmatprep.mubr.bf16.mxu0 0
        %746 = vmatmul.mubr.bf16.gmra.mrb[0].mxu0 %v519
        %v747 = vpop.f32.mrb[0].mxu0
        %v748 = vadd.f32 0.0, %v747
        %v749 = vpop.f32.mrb[0].mxu0
        %v750 = vpop.f32.mrb[0].mxu0
        %v751 = vadd.f32 0.0, %v750
        %v752 = vpop.f32.mrb[0].mxu0
        %753 = vmatprep.mubr.bf16.mxu0 0
        %754 = vmatmul.mubr.bf16.gmra.mrb[0].mxu0 %v522
        %v755 = vpop.f32.mrb[0].mxu0
        %v756 = vadd.f32 0.0, %v755
        %v757 = vpop.f32.mrb[0].mxu0
        %v758 = vpop.f32.mrb[0].mxu0
        %v759 = vadd.f32 0.0, %v758
        %v760 = vpop.f32.mrb[0].mxu0
        %761 = vmatprep.mubr.bf16.mxu0 0
        %762 = vmatmul.mubr.bf16.gmra.mrb[0].mxu0 %v525
        %v763 = vpop.f32.mrb[0].mxu0
        %v764 = vadd.f32 0.0, %v763
        %v765 = vpop.f32.mrb[0].mxu0
        %v766 = vpop.f32.mrb[0].mxu0
        %v767 = vadd.f32 0.0, %v766
        %v768 = vpop.f32.mrb[0].mxu0
        %769 = vmatprep.mubr.bf16.mxu0 0
        %770 = vmatmul.mubr.bf16.gmra.mrb[0].mxu0 %v528
        %v771 = vpop.f32.mrb[0].mxu0
        %v772 = vadd.f32 0.0, %v771
        %v773 = vpop.f32.mrb[0].mxu0
        %v774 = vpop.f32.mrb[0].mxu0
        %v775 = vadd.f32 0.0, %v774
        %v776 = vpop.f32.mrb[0].mxu0
        %777 = vmatprep.mubr.bf16.mxu0 0
        %778 = vmatmul.mubr.bf16.gmra.mrb[0].mxu0 %v531
        %v779 = vpop.f32.mrb[0].mxu0
        %v780 = vadd.f32 0.0, %v779
        %v781 = vpop.f32.mrb[0].mxu0
        %v782 = vpop.f32.mrb[0].mxu0
        %v783 = vadd.f32 0.0, %v782
        %v784 = vpop.f32.mrb[0].mxu0
        %785 = vmatprep.mubr.bf16.mxu0 0
        %786 = vmatmul.mubr.bf16.gmra.mrb[0].mxu0 %v534
        %v787 = vpop.f32.mrb[0].mxu0
        %v788 = vadd.f32 0.0, %v787
        %v789 = vpop.f32.mrb[0].mxu0
        %v790 = vpop.f32.mrb[0].mxu0
        %v791 = vadd.f32 0.0, %v790
        %v792 = vpop.f32.mrb[0].mxu0
        %793 = vmatprep.mubr.bf16.mxu0 0
        %794 = vmatmul.mubr.bf16.gmra.mrb[0].mxu0 %v537
        %v795 = vpop.f32.mrb[0].mxu0
        %v796 = vadd.f32 0.0, %v795
        %v797 = vpop.f32.mrb[0].mxu0
        %v798 = vpop.f32.mrb[0].mxu0
        %v799 = vadd.f32 0.0, %v798
        %v800 = vpop.f32.mrb[0].mxu0
        %801 = vmatprep.mubr.bf16.mxu0 0
        %802 = vmatmul.mubr.bf16.gmra.mrb[0].mxu0 %v540
        %v803 = vpop.f32.mrb[0].mxu0
        %v804 = vadd.f32 0.0, %v803
        %v805 = vpop.f32.mrb[0].mxu0
        %v806 = vpop.f32.mrb[0].mxu0
        %v807 = vadd.f32 0.0, %v806
        %v808 = vpop.f32.mrb[0].mxu0
        %809 = vmatprep.mubr.bf16.mxu0 0
        %810 = vmatmul.mubr.bf16.gmra.mrb[0].mxu0 %v543
        %v811 = vpop.f32.mrb[0].mxu0
        %v812 = vadd.f32 0.0, %v811
        %v813 = vpop.f32.mrb[0].mxu0
        %v814 = vpop.f32.mrb[0].mxu0
        %v815 = vadd.f32 0.0, %v814
        %v816 = vpop.f32.mrb[0].mxu0
        %817 = vmatprep.mubr.bf16.mxu0 0
        %818 = vmatmul.mubr.bf16.gmra.mrb[0].mxu0 %v546
        %v819 = vpop.f32.mrb[0].mxu0
        %v820 = vadd.f32 0.0, %v819
        %v821 = vpop.f32.mrb[0].mxu0
        %v822 = vpop.f32.mrb[0].mxu0
        %v823 = vadd.f32 0.0, %v822
        %v824 = vpop.f32.mrb[0].mxu0
        %825 = vmatprep.mubr.bf16.mxu0 0
        %826 = vmatmul.mubr.bf16.gmra.mrb[0].mxu0 %v549
        %v827 = vpop.f32.mrb[0].mxu0
        %v828 = vadd.f32 0.0, %v827
        %v829 = vpop.f32.mrb[0].mxu0
        %v830 = vpop.f32.mrb[0].mxu0
        %v831 = vadd.f32 0.0, %v830
        %v832 = vpop.f32.mrb[0].mxu0
        %833 = vmatprep.mubr.bf16.mxu0 0
        %834 = vmatmul.mubr.bf16.gmra.mrb[0].mxu0 %v552
        %v835 = vpop.f32.mrb[0].mxu0
        %v836 = vadd.f32 0.0, %v835
        %v837 = vpop.f32.mrb[0].mxu0
        %v838 = vpop.f32.mrb[0].mxu0
        %v839 = vadd.f32 0.0, %v838
        %v840 = vpop.f32.mrb[0].mxu0
        %841 = vmatprep.mubr.bf16.mxu0 0
        %842 = vmatmul.mubr.bf16.gmra.mrb[0].mxu0 %v555
        %v843 = vpop.f32.mrb[0].mxu0
        %v844 = vadd.f32 0.0, %v843
        %v845 = vpop.f32.mrb[0].mxu0
        %v846 = vpop.f32.mrb[0].mxu0
        %v847 = vadd.f32 0.0, %v846
        %v848 = vpop.f32.mrb[0].mxu0
        %849 = vdwg.mxu0
        %850 = vst [vmem:[%s195] sm:$0xff] %v596
        %851 = vst [vmem:[%s195 + $0x8] sm:$0xff] %v599
        %852 = vst [vmem:[%s195 + $0x10] sm:$0xff] %v604
        %853 = vst [vmem:[%s195 + $0x18] sm:$0xff] %v607
        %854 = vst [vmem:[%s195 + $0x20] sm:$0xff] %v612
        %855 = vst [vmem:[%s195 + $0x28] sm:$0xff] %v615
        %856 = vst [vmem:[%s195 + $0x30] sm:$0xff] %v620
        %857 = vst [vmem:[%s195 + $0x38] sm:$0xff] %v623
        %858 = vst [vmem:[%s195 + $0x40] sm:$0xff] %v628
        %859 = vst [vmem:[%s195 + $0x48] sm:$0xff] %v631
        %860 = vst [vmem:[%s195 + $0x50] sm:$0xff] %v636
        %861 = vst [vmem:[%s195 + $0x58] sm:$0xff] %v639
        %862 = vst [vmem:[%s195 + $0x60] sm:$0xff] %v644
        %863 = vst [vmem:[%s195 + $0x68] sm:$0xff] %v647
        %864 = vst [vmem:[%s195 + $0x70] sm:$0xff] %v652
        %865 = vst [vmem:[%s195 + $0x78] sm:$0xff] %v655
        %866 = vst [vmem:[%s195 + $0x80] sm:$0xff] %v660
        %867 = vst [vmem:[%s195 + $0x88] sm:$0xff] %v663
        %868 = vst [vmem:[%s195 + $0x90] sm:$0xff] %v668
        %869 = vst [vmem:[%s195 + $0x98] sm:$0xff] %v671
        %870 = vst [vmem:[%s195 + $0xa0] sm:$0xff] %v676
        %871 = vst [vmem:[%s195 + $0xa8] sm:$0xff] %v679
        %872 = vst [vmem:[%s195 + $0xb0] sm:$0xff] %v684
        %873 = vst [vmem:[%s195 + $0xb8] sm:$0xff] %v687
        %874 = vst [vmem:[%s195 + $0xc0] sm:$0xff] %v692
        %875 = vst [vmem:[%s195 + $0xc8] sm:$0xff] %v695
        %876 = vst [vmem:[%s195 + $0xd0] sm:$0xff] %v700
        %877 = vst [vmem:[%s195 + $0xd8] sm:$0xff] %v703
        %878 = vst [vmem:[%s195 + $0xe0] sm:$0xff] %v708
        %879 = vst [vmem:[%s195 + $0xe8] sm:$0xff] %v711
        %880 = vst [vmem:[%s195 + $0xf0] sm:$0xff] %v716
        %881 = vst [vmem:[%s195 + $0xf8] sm:$0xff] %v719
        %882 = vst [vmem:[%s195 + $0x100] sm:$0xff] %v724
        %883 = vst [vmem:[%s195 + $0x108] sm:$0xff] %v727
        %884 = vst [vmem:[%s195 + $0x110] sm:$0xff] %v732
        %885 = vst [vmem:[%s195 + $0x118] sm:$0xff] %v735
        %886 = vst [vmem:[%s195 + $0x120] sm:$0xff] %v740
        %887 = vst [vmem:[%s195 + $0x128] sm:$0xff] %v743
        %888 = vst [vmem:[%s195 + $0x130] sm:$0xff] %v748
        %889 = vst [vmem:[%s195 + $0x138] sm:$0xff] %v751
        %890 = vst [vmem:[%s195 + $0x140] sm:$0xff] %v756
        %891 = vst [vmem:[%s195 + $0x148] sm:$0xff] %v759
        %892 = vst [vmem:[%s195 + $0x150] sm:$0xff] %v764
        %893 = vst [vmem:[%s195 + $0x158] sm:$0xff] %v767
        %894 = vst [vmem:[%s195 + $0x160] sm:$0xff] %v772
        %895 = vst [vmem:[%s195 + $0x168] sm:$0xff] %v775
        %896 = vst [vmem:[%s195 + $0x170] sm:$0xff] %v780
        %897 = vst [vmem:[%s195 + $0x178] sm:$0xff] %v783
        %898 = vst [vmem:[%s195 + $0x180] sm:$0xff] %v788
        %899 = vst [vmem:[%s195 + $0x188] sm:$0xff] %v791
        %900 = vst [vmem:[%s195 + $0x190] sm:$0xff] %v796
        %901 = vst [vmem:[%s195 + $0x198] sm:$0xff] %v799
        %902 = vst [vmem:[%s195 + $0x1a0] sm:$0xff] %v804
        %903 = vst [vmem:[%s195 + $0x1a8] sm:$0xff] %v807
        %904 = vst [vmem:[%s195 + $0x1b0] sm:$0xff] %v812
        %905 = vst [vmem:[%s195 + $0x1b8] sm:$0xff] %v815
        %906 = vst [vmem:[%s195 + $0x1c0] sm:$0xff] %v820
        %907 = vst [vmem:[%s195 + $0x1c8] sm:$0xff] %v823
        %908 = vst [vmem:[%s195 + $0x1d0] sm:$0xff] %v828
        %909 = vst [vmem:[%s195 + $0x1d8] sm:$0xff] %v831
        %910 = vst [vmem:[%s195 + $0x1e0] sm:$0xff] %v836
        %911 = vst [vmem:[%s195 + $0x1e8] sm:$0xff] %v839
        %912 = vst [vmem:[%s195 + $0x1f0] sm:$0xff] %v844
        %913 = vst [vmem:[%s195 + $0x1f8] sm:$0xff] %v847
        %v914 = vadd.f32 %v596, %v599
        %v915 = vadd.f32 %v914, %v604
        %v916 = vadd.f32 %v915, %v607
        %v917 = vadd.f32 %v916, %v612
        %v918 = vadd.f32 %v917, %v615
        %v919 = vadd.f32 %v918, %v620
        %v920 = vadd.f32 %v919, %v623
        %v921 = vadd.f32 %v920, %v628
        %v922 = vadd.f32 %v921, %v631
        %v923 = vadd.f32 %v922, %v636
        %v924 = vadd.f32 %v923, %v639
        %v925 = vadd.f32 %v924, %v644
        %v926 = vadd.f32 %v925, %v647
        %v927 = vadd.f32 %v926, %v652
        %v928 = vadd.f32 %v927, %v655
        %v929 = vadd.f32 %v928, %v660
        %v930 = vadd.f32 %v929, %v663
        %v931 = vadd.f32 %v930, %v668
        %v932 = vadd.f32 %v931, %v671
        %v933 = vadd.f32 %v932, %v676
        %v934 = vadd.f32 %v933, %v679
        %v935 = vadd.f32 %v934, %v684
        %v936 = vadd.f32 %v935, %v687
        %v937 = vadd.f32 %v936, %v692
        %v938 = vadd.f32 %v937, %v695
        %v939 = vadd.f32 %v938, %v700
        %v940 = vadd.f32 %v939, %v703
        %v941 = vadd.f32 %v940, %v708
        %v942 = vadd.f32 %v941, %v711
        %v943 = vadd.f32 %v942, %v716
        %v944 = vadd.f32 %v943, %v719
        %v945 = vadd.f32 %v944, %v724
        %v946 = vadd.f32 %v945, %v727
        %v947 = vadd.f32 %v946, %v732
        %v948 = vadd.f32 %v947, %v735
        %v949 = vadd.f32 %v948, %v740
        %v950 = vadd.f32 %v949, %v743
        %v951 = vadd.f32 %v950, %v748
        %v952 = vadd.f32 %v951, %v751
        %v953 = vadd.f32 %v952, %v756
        %v954 = vadd.f32 %v953, %v759
        %v955 = vadd.f32 %v954, %v764
        %v956 = vadd.f32 %v955, %v767
        %v957 = vadd.f32 %v956, %v772
        %v958 = vadd.f32 %v957, %v775
        %v959 = vadd.f32 %v958, %v780
        %v960 = vadd.f32 %v959, %v783
        %v961 = vadd.f32 %v960, %v788
        %v962 = vadd.f32 %v961, %v791
        %v963 = vadd.f32 %v962, %v796
        %v964 = vadd.f32 %v963, %v799
        %v965 = vadd.f32 %v964, %v804
        %v966 = vadd.f32 %v965, %v807
        %v967 = vadd.f32 %v966, %v812
        %v968 = vadd.f32 %v967, %v815
        %v969 = vadd.f32 %v968, %v820
        %v970 = vadd.f32 %v969, %v823
        %v971 = vadd.f32 %v970, %v828
        %v972 = vadd.f32 %v971, %v831
        %v973 = vadd.f32 %v972, %v836
        %v974 = vadd.f32 %v973, %v839
        %v975 = vadd.f32 %v974, %v844
        %v976 = vadd.f32 %v975, %v847
        %v977 = vrot.slane %v976, 4
        %v978 = vadd.f32 %v976, %v977
        %v979 = vrot.slane %v978, 2
        %v980 = vadd.f32 %v978, %v979
        %v981 = vrot.slane %v980, 1
        %v982 = vadd.f32 %v980, %v981
        %983 = vst [vmem:[%s201] sm:$0x1] %v982
        %v984 = vmul.f32 %v596, %v596
        %v985 = vmul.f32 %v599, %v599
        %v986 = vmul.f32 %v604, %v604
        %v987 = vmul.f32 %v607, %v607
        %v988 = vmul.f32 %v612, %v612
        %v989 = vmul.f32 %v615, %v615
        %v990 = vmul.f32 %v620, %v620
        %v991 = vmul.f32 %v623, %v623
        %v992 = vmul.f32 %v628, %v628
        %v993 = vmul.f32 %v631, %v631
        %v994 = vmul.f32 %v636, %v636
        %v995 = vmul.f32 %v639, %v639
        %v996 = vmul.f32 %v644, %v644
        %v997 = vmul.f32 %v647, %v647
        %v998 = vmul.f32 %v652, %v652
        %v999 = vmul.f32 %v655, %v655
        %v1000 = vmul.f32 %v660, %v660
        %v1001 = vmul.f32 %v663, %v663
        %v1002 = vmul.f32 %v668, %v668
        %v1003 = vmul.f32 %v671, %v671
        %v1004 = vmul.f32 %v676, %v676
        %v1005 = vmul.f32 %v679, %v679
        %v1006 = vmul.f32 %v684, %v684
        %v1007 = vmul.f32 %v687, %v687
        %v1008 = vmul.f32 %v692, %v692
        %v1009 = vmul.f32 %v695, %v695
        %v1010 = vmul.f32 %v700, %v700
        %v1011 = vmul.f32 %v703, %v703
        %v1012 = vmul.f32 %v708, %v708
        %v1013 = vmul.f32 %v711, %v711
        %v1014 = vmul.f32 %v716, %v716
        %v1015 = vmul.f32 %v719, %v719
        %v1016 = vmul.f32 %v724, %v724
        %v1017 = vmul.f32 %v727, %v727
        %v1018 = vmul.f32 %v732, %v732
        %v1019 = vmul.f32 %v735, %v735
        %v1020 = vmul.f32 %v740, %v740
        %v1021 = vmul.f32 %v743, %v743
        %v1022 = vmul.f32 %v748, %v748
        %v1023 = vmul.f32 %v751, %v751
        %v1024 = vmul.f32 %v756, %v756
        %v1025 = vmul.f32 %v759, %v759
        %v1026 = vmul.f32 %v764, %v764
        %v1027 = vmul.f32 %v767, %v767
        %v1028 = vmul.f32 %v772, %v772
        %v1029 = vmul.f32 %v775, %v775
        %v1030 = vmul.f32 %v780, %v780
        %v1031 = vmul.f32 %v783, %v783
        %v1032 = vmul.f32 %v788, %v788
        %v1033 = vmul.f32 %v791, %v791
        %v1034 = vmul.f32 %v796, %v796
        %v1035 = vmul.f32 %v799, %v799
        %v1036 = vmul.f32 %v804, %v804
        %v1037 = vmul.f32 %v807, %v807
        %v1038 = vmul.f32 %v812, %v812
        %v1039 = vmul.f32 %v815, %v815
        %v1040 = vmul.f32 %v820, %v820
        %v1041 = vmul.f32 %v823, %v823
        %v1042 = vmul.f32 %v828, %v828
        %v1043 = vmul.f32 %v831, %v831
        %v1044 = vmul.f32 %v836, %v836
        %v1045 = vmul.f32 %v839, %v839
        %v1046 = vmul.f32 %v844, %v844
        %v1047 = vmul.f32 %v847, %v847
        %v1048 = vadd.f32 %v984, %v985
        %v1049 = vadd.f32 %v1048, %v986
        %v1050 = vadd.f32 %v1049, %v987
        %v1051 = vadd.f32 %v1050, %v988
        %v1052 = vadd.f32 %v1051, %v989
        %v1053 = vadd.f32 %v1052, %v990
        %v1054 = vadd.f32 %v1053, %v991
        %v1055 = vadd.f32 %v1054, %v992
        %v1056 = vadd.f32 %v1055, %v993
        %v1057 = vadd.f32 %v1056, %v994
        %v1058 = vadd.f32 %v1057, %v995
        %v1059 = vadd.f32 %v1058, %v996
        %v1060 = vadd.f32 %v1059, %v997
        %v1061 = vadd.f32 %v1060, %v998
        %v1062 = vadd.f32 %v1061, %v999
        %v1063 = vadd.f32 %v1062, %v1000
        %v1064 = vadd.f32 %v1063, %v1001
        %v1065 = vadd.f32 %v1064, %v1002
        %v1066 = vadd.f32 %v1065, %v1003
        %v1067 = vadd.f32 %v1066, %v1004
        %v1068 = vadd.f32 %v1067, %v1005
        %v1069 = vadd.f32 %v1068, %v1006
        %v1070 = vadd.f32 %v1069, %v1007
        %v1071 = vadd.f32 %v1070, %v1008
        %v1072 = vadd.f32 %v1071, %v1009
        %v1073 = vadd.f32 %v1072, %v1010
        %v1074 = vadd.f32 %v1073, %v1011
        %v1075 = vadd.f32 %v1074, %v1012
        %v1076 = vadd.f32 %v1075, %v1013
        %v1077 = vadd.f32 %v1076, %v1014
        %v1078 = vadd.f32 %v1077, %v1015
        %v1079 = vadd.f32 %v1078, %v1016
        %v1080 = vadd.f32 %v1079, %v1017
        %v1081 = vadd.f32 %v1080, %v1018
        %v1082 = vadd.f32 %v1081, %v1019
        %v1083 = vadd.f32 %v1082, %v1020
        %v1084 = vadd.f32 %v1083, %v1021
        %v1085 = vadd.f32 %v1084, %v1022
        %v1086 = vadd.f32 %v1085, %v1023
        %v1087 = vadd.f32 %v1086, %v1024
        %v1088 = vadd.f32 %v1087, %v1025
        %v1089 = vadd.f32 %v1088, %v1026
        %v1090 = vadd.f32 %v1089, %v1027
        %v1091 = vadd.f32 %v1090, %v1028
        %v1092 = vadd.f32 %v1091, %v1029
        %v1093 = vadd.f32 %v1092, %v1030
        %v1094 = vadd.f32 %v1093, %v1031
        %v1095 = vadd.f32 %v1094, %v1032
        %v1096 = vadd.f32 %v1095, %v1033
        %v1097 = vadd.f32 %v1096, %v1034
        %v1098 = vadd.f32 %v1097, %v1035
        %v1099 = vadd.f32 %v1098, %v1036
        %v1100 = vadd.f32 %v1099, %v1037
        %v1101 = vadd.f32 %v1100, %v1038
        %v1102 = vadd.f32 %v1101, %v1039
        %v1103 = vadd.f32 %v1102, %v1040
        %v1104 = vadd.f32 %v1103, %v1041
        %v1105 = vadd.f32 %v1104, %v1042
        %v1106 = vadd.f32 %v1105, %v1043
        %v1107 = vadd.f32 %v1106, %v1044
        %v1108 = vadd.f32 %v1107, %v1045
        %v1109 = vadd.f32 %v1108, %v1046
        %v1110 = vadd.f32 %v1109, %v1047
        %v1111 = vrot.slane %v1110, 4
        %v1112 = vadd.f32 %v1110, %v1111
        %v1113 = vrot.slane %v1112, 2
        %v1114 = vadd.f32 %v1112, %v1113
        %v1115 = vrot.slane %v1114, 1
        %v1116 = vadd.f32 %v1114, %v1115
        %1117 = vst [vmem:[%s207] sm:$0x1] %v1116
        %s1118 = sand.u32 %s77, 1
        %s1119 = scalar_lea.sflag [#allocation3], %s1118
        %s1120 = sand.u32 %s77, 1
        %s1121 = smul.addr %s1120, 512
        %s1122 = scalar_lea.vmem [#allocation2], %s1121
        %s1123 = sand.u32 %s22, 1
        %s1124 = scalar_lea.sflag [#allocation5], %s1123
        %s1125 = sand.u32 %s103, 1
        %s1126 = scalar_lea.vmem [#allocation4], %s1125
        %s1127 = sand.u32 %s22, 1
        %s1128 = scalar_lea.sflag [#allocation5], %s1127
        %s1129 = sand.u32 %s129, 1
        %s1130 = scalar_lea.vmem [#allocation6], %s1129
        // Predicated region
        $region29: #{tpu_custom_call.1} parent=27 // pred_check
          %p1131 = pneg %p87
        $region30: #{tpu_custom_call.1} parent=27 // pred_check_branch
          %1133 = sbr.rel (%p1131) target = $region32
        $region31: #{tpu_custom_call.1} parent=27 // pred_region
          %s1134 = smul.u32 64, %s22
          %s1136 = ssub.s32 8192, 8192
          %1137 = vsyncadd %s1119, %s1136
          %s1138 = smul.addr %s1134, 128
          %s1139 = scalar_lea.hbm %s2, %s1138
          %s1140 = sshll.u32 %s1122, 4
          %s1141 = int_to_ptr.vmem [resolvable:$true] %s1140
          %1146 = dma.vmem_to_hbm [thread:$0]  %s1141, 8192, %s1139, %s1119, 128, 128, 8
        $region32: #{tpu_custom_call.1} parent=27 // pred_fallthru
          _
        // Predicated region
        $region33: #{tpu_custom_call.1} parent=27 // pred_check
          %p1147 = pneg %p113
        $region34: #{tpu_custom_call.1} parent=27 // pred_check_branch
          %1149 = sbr.rel (%p1147) target = $region36
        $region35: #{tpu_custom_call.1} parent=27 // pred_region
          %s1151 = ssub.s32 16, 16
          %1152 = vsyncadd %s1124, %s1151
          %s1153 = smul.addr %s22, 16
          %s1154 = scalar_lea.hbm %s3, %s1153
          %s1156 = sshll.u32 %s1126, 4
          %s1157 = int_to_ptr.vmem [resolvable:$true] %s1156
          %1159 = dma.vmem_to_hbm [thread:$0]  %s1157, 16, %s1154, %s1124
        $region36: #{tpu_custom_call.1} parent=27 // pred_fallthru
          _
        // Predicated region
        $region37: #{tpu_custom_call.1} parent=27 // pred_check
          %p1160 = pneg %p139
        $region38: #{tpu_custom_call.1} parent=27 // pred_check_branch
          %1162 = sbr.rel (%p1160) target = $region40
        $region39: #{tpu_custom_call.1} parent=27 // pred_region
          %s1164 = ssub.s32 16, 16
          %1165 = vsyncadd %s1128, %s1164
          %s1166 = smul.addr %s22, 16
          %s1167 = scalar_lea.hbm %s4, %s1166
          %s1169 = sshll.u32 %s1130, 4
          %s1170 = int_to_ptr.vmem [resolvable:$true] %s1169
          %1172 = dma.vmem_to_hbm [thread:$0]  %s1170, 16, %s1167, %s1128
        $region40: #{tpu_custom_call.1} parent=27 // pred_fallthru
          _
      $region28: #{tpu_custom_call.1} parent=5 // pred_fallthru
        _
      %p1173 = scmp.le.s32.totalorder 2, %s17
      // Predicated region
      $region41: #{tpu_custom_call.1} parent=5 // pred_check
        %p1174 = pneg %p1173
      $region42: #{tpu_custom_call.1} parent=5 // pred_check_branch
        %1176 = sbr.rel (%p1174) target = $region44
      $region43: #{tpu_custom_call.1} parent=5 // pred_region
        %s1177 = ssub.s32 %s17, 2
        // Predicated region
        $region45: #{tpu_custom_call.1} parent=43 // pred_check
          %p1178 = pneg %p93
        $region46: #{tpu_custom_call.1} parent=43 // pred_check_branch
          %1180 = sbr.rel (%p1178) target = $region48
        $region47: #{tpu_custom_call.1} parent=43 // pred_region
          %s1181 = sand.u32 %s78, 1
          %s1182 = scalar_lea.sflag [#allocation3], %s1181
          %s1183 = sand.u32 %s78, 1
          %s1184 = smul.addr %s1183, 512
          %s1185 = scalar_lea.vmem [#allocation2], %s1184
          %1186 = dma.done %s1182, 8192
        $region48: #{tpu_custom_call.1} parent=43 // pred_fallthru
          _
        // Predicated region
        $region49: #{tpu_custom_call.1} parent=43 // pred_check
          %p1187 = pneg %p119
        $region50: #{tpu_custom_call.1} parent=43 // pred_check_branch
          %1189 = sbr.rel (%p1187) target = $region52
        $region51: #{tpu_custom_call.1} parent=43 // pred_region
          %s1190 = sand.u32 %s23, 1
          %s1191 = scalar_lea.sflag [#allocation5], %s1190
          %s1192 = sand.u32 %s104, 1
          %s1193 = scalar_lea.vmem [#allocation4], %s1192
          %1194 = dma.done %s1191, 16
        $region52: #{tpu_custom_call.1} parent=43 // pred_fallthru
          _
        // Predicated region
        $region53: #{tpu_custom_call.1} parent=43 // pred_check
          %p1195 = pneg %p145
        $region54: #{tpu_custom_call.1} parent=43 // pred_check_branch
          %1197 = sbr.rel (%p1195) target = $region56
        $region55: #{tpu_custom_call.1} parent=43 // pred_region
          %s1198 = sand.u32 %s23, 1
          %s1199 = scalar_lea.sflag [#allocation5], %s1198
          %s1200 = sand.u32 %s130, 1
          %s1201 = scalar_lea.vmem [#allocation6], %s1200
          %1202 = dma.done %s1199, 16
        $region56: #{tpu_custom_call.1} parent=43 // pred_fallthru
          _
      $region44: #{tpu_custom_call.1} parent=5 // pred_fallthru
        _
    $region6: #{tpu_custom_call.1} parent=1 // loop_footer
      %s21 = sadd.s32 1, %s17
    $region7: #{tpu_custom_call.1} parent=1 // loop_footer_branch
      %16 = sbr.rel target = $region3
    $region8: #{tpu_custom_call.1} parent=1 // loop_exit
      _
    %1203 = vsyncpa [#allocation3], 1
    %s1204 = scalar_lea.sflag [#allocation3], 1
    %1205 = vsyncpa %s1204, 1
    %1206 = vsyncpa [#allocation5], 1
    %s1207 = scalar_lea.sflag [#allocation5], 1
    %1208 = vsyncpa %s1207, 1

</llo_original>
